<compile_context>
chip_gen: v7x
topology: tpu7x:2x2x1
jax: 0.10.0
libtpu: 0.0.40
codegen_flags: <defaults>
</compile_context>

<pallas_src>
import functools

import jax
import jax.numpy as jnp
from jax import lax
from jax.experimental import pallas as pl
from jax.experimental.pallas import tpu as pltpu

_LANE = 128


def _max_identity(dtype):
    dtype = jnp.dtype(dtype)
    if jnp.issubdtype(dtype, jnp.floating):
        return float("-inf")
    if jnp.issubdtype(dtype, jnp.integer):
        return int(jnp.iinfo(dtype).min)
    if dtype == jnp.bool_:
        return False
    raise NotImplementedError(f"PoolMax: unsupported dtype {dtype}")


def _sublane(itemsize):
    # sublane packing: 8 rows for 32-bit, 16 for 16-bit, 32 for 8-bit dtypes
    return {1: 32, 2: 16}.get(itemsize, 8)


def _round_down(x, m):
    return (x // m) * m


def _pick_tb(bk, row_bytes, sub, target_bytes, max_rows):
    """Rows of the BK (reduction) axis per block."""
    budget_rows = max(1, target_bytes // max(row_bytes, 1))
    if bk <= min(budget_rows, max_rows):
        return bk                       # whole reduction axis in a single block
    if bk <= sub:
        return bk
    tb = min(budget_rows, max_rows, bk)
    return max(_round_down(tb, sub), sub)


def _pick_tn(m, tb, itemsize, target_bytes, total_bytes, megacore_bytes):
    """Lane-axis tile: a 128-multiple divisor of M, or the full extent."""
    if m % _LANE != 0:
        return m                        # full trailing extent is always legal
    q = m // _LANE
    budget_units = max(1, target_bytes // max(tb * itemsize * _LANE, 1))
    cap = min(q, budget_units)
    if total_bytes >= megacore_bytes and q >= 2:
        cap = min(cap, max(1, q // 2))  # >= 2 output tiles so both v7x cores get work
    for d in range(cap, 0, -1):
        if q % d == 0:
            return d * _LANE
    return _LANE


def _make_kernel(*, bk, tb, tn, acc_rows, grid_k, identity, need_mask):
    """Build the kernel body for the chosen tiling (all sizes are static)."""
    nfull = tb // acc_rows
    offsets = [i * acc_rows for i in range(nfull)]
    if tb % acc_rows:
        # Overlapping final chunk; max is idempotent so re-reducing rows is fine.
        offsets.append(tb - acc_rows)
    # Rows that are valid in the LAST reduction block (== tb when no tail).
    tail_valid = bk - (grid_k - 1) * tb

    def reduce_block(x_ref, k):
        """(tb, tn) block -> (acc_rows, tn) partial max via pure-VPU chunk maxes."""
        if need_mask:
            is_last = k == grid_k - 1
            base = lax.broadcasted_iota(jnp.int32, (acc_rows, tn), 0)
        part = None
        for i in offsets:
            c = x_ref[i:i + acc_rows, :]
            if need_mask and i + acc_rows > tail_valid:
                # Rows >= tail_valid of the final (clamped-DMA) block are stale
                # VMEM; neutralise them with the max identity.
                limit = jnp.where(is_last, tail_valid - i, acc_rows)
                c = jnp.where(base < limit, c, identity)
            part = c if part is None else jnp.maximum(part, c)
        return part

    if grid_k == 1:
        def kernel_single(x_ref, o_ref):
            o_ref[...] = jnp.max(reduce_block(x_ref, 0), axis=0, keepdims=True)
        return kernel_single

    def kernel(x_ref, o_ref, acc_ref):
        k = pl.program_id(1)
        part = reduce_block(x_ref, k)

        @pl.when(k == 0)
        def _init():
            acc_ref[...] = part

        @pl.when(k > 0)
        def _update():
            acc_ref[...] = jnp.maximum(acc_ref[...], part)

        @pl.when(k == grid_k - 1)
        def _finalize():
            o_ref[...] = jnp.max(acc_ref[...], axis=0, keepdims=True)

    return kernel


@functools.partial(
    jax.jit,
    static_argnames=("target_block_bytes", "megacore_bytes", "max_block_rows"),
)
def pool_max(x, *, target_block_bytes=4 << 20, megacore_bytes=16 << 20,
             max_block_rows=2048):
    """Max over axis 0 of x:(BK, S, N) -> (S, N); matches PoolMax.forward."""
    BK, S, N = x.shape
    dtype = jnp.dtype(x.dtype)
    itemsize = dtype.itemsize
    identity = _max_identity(dtype)
    sub = _sublane(itemsize)

    M = S * N
    xf = x.reshape(BK, M)               # bitcast reshape (no HBM copy under jit)
    total_bytes = BK * M * itemsize

    # --- tile selection: ~target_block_bytes per input block ---
    TB = _pick_tb(BK, M * itemsize, sub, target_block_bytes, max_block_rows)
    tN = _pick_tn(M, TB, itemsize, target_block_bytes, total_bytes, megacore_bytes)
    if tN < M:                          # lane axis got split: re-grow TB to fill budget
        TB = _pick_tb(BK, tN * itemsize, sub, target_block_bytes, max_block_rows)

    grid_m = M // tN
    grid_k = pl.cdiv(BK, TB)
    need_mask = (BK % TB) != 0
    acc_rows = min(sub, TB)
    n_steps = grid_m * grid_k

    kernel = _make_kernel(bk=BK, tb=TB, tn=tN, acc_rows=acc_rows,
                          grid_k=grid_k, identity=identity, need_mask=need_mask)

    idx_map = lambda m, k: (k, m)
    if n_steps >= 3:
        try:
            # Third buffer keeps a DMA queued across each step boundary.
            in_spec = pl.BlockSpec((TB, tN), idx_map, pipeline_mode=pl.Buffered(3))
        except TypeError:               # older jax without pipeline_mode on BlockSpec
            in_spec = pl.BlockSpec((TB, tN), idx_map)
    else:
        in_spec = pl.BlockSpec((TB, tN), idx_map)

    scratch = [] if grid_k == 1 else [pltpu.VMEM((acc_rows, tN), dtype)]

    block_bytes = TB * tN * itemsize
    vmem_limit = int(min(64 << 20, max(32 << 20, 4 * block_bytes)))

    out2d = pl.pallas_call(
        kernel,
        out_shape=jax.ShapeDtypeStruct((1, M), dtype),
        grid_spec=pltpu.PrefetchScalarGridSpec(
            num_scalar_prefetch=0,
            grid=(grid_m, grid_k),                        # reduction axis LAST
            in_specs=[in_spec],
            out_specs=pl.BlockSpec((1, tN), lambda m, k: (0, m)),
            scratch_shapes=scratch,
        ),
        compiler_params=pltpu.CompilerParams(
            dimension_semantics=("parallel", "arbitrary"),
            vmem_limit_bytes=vmem_limit,
        ),
    )(xf)

    return out2d.reshape(S, N)


if __name__ == "__main__":
    key = jax.random.PRNGKey(0)

    # (BK, S, N) test cases:
    #   (250, 10, 64):  module docstring example (whole-BK block, lane-dense 640 axis)
    #   (300,  8, 48):  BK not a multiple of 8 -> overlapping tail chunk, no padding
    #   ( 16, 512,128): one ~4 MiB block
    #   ( 16, 72, 100): S*N not a multiple of 128 -> full-extent lane tile, no padding
    #   (2500,10, 64):  multi-step reduction with a masked ragged tail block
    #   ( 64, 16, 64) + tiny block budget: forces grid_m >= 2, grid_k > 1 and the
    #                   Buffered(3) input pipeline on a small array
    cases = [
        ((250, 10, 64), {}),
        ((300, 8, 48), {}),
        ((16, 512, 128), {}),
        ((16, 72, 100), {}),
        ((2500, 10, 64), {}),
        ((64, 16, 64), dict(target_block_bytes=32 << 10, megacore_bytes=1)),
    ]

    for shape, kw in cases:
        key, subkey = jax.random.split(key)
        x = jax.random.normal(subkey, shape, dtype=jnp.float32)
        out = jax.block_until_ready(pool_max(x, **kw))
        ref = jnp.max(x, axis=0)        # == x.permute(1, 0, 2).max(dim=1)[0]
        assert out.shape == shape[1:], (out.shape, shape)
        assert jnp.allclose(out, ref), f"mismatch vs reference for {shape} {kw}"

    print("KERNEL_OK")
</pallas_src>

<mosaic_0001>
module attributes {stable_mosaic.version = 11 : i64} {
  func.func @kernel_single(%arg0: i32, %arg1: i32, %arg2: memref<250x640xf32, #tpu.memory_space<vmem>>, %arg3: memref<1x640xf32, #tpu.memory_space<vmem>>) attributes {dimension_semantics = [#tpu.dimension_semantics<parallel>, #tpu.dimension_semantics<arbitrary>], iteration_bounds = array<i64: 1, 1>, scalar_prefetch = 0 : i64, scratch_operands = 0 : i64, tpu.core_type = #tpu.core_type<tc>, window_params = [{transform_indices = @transform_0, window_bounds = array<i64: 250, 640>}, {transform_indices = @transform_1, window_bounds = array<i64: 1, 640>}]} {
    %c0 = arith.constant 0 : index
    %c0_0 = arith.constant 0 : index
    %0 = vector.load %arg2[%c0, %c0_0] : memref<250x640xf32, #tpu.memory_space<vmem>>, vector<8x640xf32>
    %c8 = arith.constant 8 : index
    %c0_1 = arith.constant 0 : index
    %1 = vector.load %arg2[%c8, %c0_1] : memref<250x640xf32, #tpu.memory_space<vmem>>, vector<8x640xf32>
    %2 = arith.maximumf %0, %1 : vector<8x640xf32>
    %c16 = arith.constant 16 : index
    %c0_2 = arith.constant 0 : index
    %3 = vector.load %arg2[%c16, %c0_2] : memref<250x640xf32, #tpu.memory_space<vmem>>, vector<8x640xf32>
    %4 = arith.maximumf %2, %3 : vector<8x640xf32>
    %c24 = arith.constant 24 : index
    %c0_3 = arith.constant 0 : index
    %5 = vector.load %arg2[%c24, %c0_3] : memref<250x640xf32, #tpu.memory_space<vmem>>, vector<8x640xf32>
    %6 = arith.maximumf %4, %5 : vector<8x640xf32>
    %c32 = arith.constant 32 : index
    %c0_4 = arith.constant 0 : index
    %7 = vector.load %arg2[%c32, %c0_4] : memref<250x640xf32, #tpu.memory_space<vmem>>, vector<8x640xf32>
    %8 = arith.maximumf %6, %7 : vector<8x640xf32>
    %c40 = arith.constant 40 : index
    %c0_5 = arith.constant 0 : index
    %9 = vector.load %arg2[%c40, %c0_5] : memref<250x640xf32, #tpu.memory_space<vmem>>, vector<8x640xf32>
    %10 = arith.maximumf %8, %9 : vector<8x640xf32>
    %c48 = arith.constant 48 : index
    %c0_6 = arith.constant 0 : index
    %11 = vector.load %arg2[%c48, %c0_6] : memref<250x640xf32, #tpu.memory_space<vmem>>, vector<8x640xf32>
    %12 = arith.maximumf %10, %11 : vector<8x640xf32>
    %c56 = arith.constant 56 : index
    %c0_7 = arith.constant 0 : index
    %13 = vector.load %arg2[%c56, %c0_7] : memref<250x640xf32, #tpu.memory_space<vmem>>, vector<8x640xf32>
    %14 = arith.maximumf %12, %13 : vector<8x640xf32>
    %c64 = arith.constant 64 : index
    %c0_8 = arith.constant 0 : index
    %15 = vector.load %arg2[%c64, %c0_8] : memref<250x640xf32, #tpu.memory_space<vmem>>, vector<8x640xf32>
    %16 = arith.maximumf %14, %15 : vector<8x640xf32>
    %c72 = arith.constant 72 : index
    %c0_9 = arith.constant 0 : index
    %17 = vector.load %arg2[%c72, %c0_9] : memref<250x640xf32, #tpu.memory_space<vmem>>, vector<8x640xf32>
    %18 = arith.maximumf %16, %17 : vector<8x640xf32>
    %c80 = arith.constant 80 : index
    %c0_10 = arith.constant 0 : index
    %19 = vector.load %arg2[%c80, %c0_10] : memref<250x640xf32, #tpu.memory_space<vmem>>, vector<8x640xf32>
    %20 = arith.maximumf %18, %19 : vector<8x640xf32>
    %c88 = arith.constant 88 : index
    %c0_11 = arith.constant 0 : index
    %21 = vector.load %arg2[%c88, %c0_11] : memref<250x640xf32, #tpu.memory_space<vmem>>, vector<8x640xf32>
    %22 = arith.maximumf %20, %21 : vector<8x640xf32>
    %c96 = arith.constant 96 : index
    %c0_12 = arith.constant 0 : index
    %23 = vector.load %arg2[%c96, %c0_12] : memref<250x640xf32, #tpu.memory_space<vmem>>, vector<8x640xf32>
    %24 = arith.maximumf %22, %23 : vector<8x640xf32>
    %c104 = arith.constant 104 : index
    %c0_13 = arith.constant 0 : index
    %25 = vector.load %arg2[%c104, %c0_13] : memref<250x640xf32, #tpu.memory_space<vmem>>, vector<8x640xf32>
    %26 = arith.maximumf %24, %25 : vector<8x640xf32>
    %c112 = arith.constant 112 : index
    %c0_14 = arith.constant 0 : index
    %27 = vector.load %arg2[%c112, %c0_14] : memref<250x640xf32, #tpu.memory_space<vmem>>, vector<8x640xf32>
    %28 = arith.maximumf %26, %27 : vector<8x640xf32>
    %c120 = arith.constant 120 : index
    %c0_15 = arith.constant 0 : index
    %29 = vector.load %arg2[%c120, %c0_15] : memref<250x640xf32, #tpu.memory_space<vmem>>, vector<8x640xf32>
    %30 = arith.maximumf %28, %29 : vector<8x640xf32>
    %c128 = arith.constant 128 : index
    %c0_16 = arith.constant 0 : index
    %31 = vector.load %arg2[%c128, %c0_16] : memref<250x640xf32, #tpu.memory_space<vmem>>, vector<8x640xf32>
    %32 = arith.maximumf %30, %31 : vector<8x640xf32>
    %c136 = arith.constant 136 : index
    %c0_17 = arith.constant 0 : index
    %33 = vector.load %arg2[%c136, %c0_17] : memref<250x640xf32, #tpu.memory_space<vmem>>, vector<8x640xf32>
    %34 = arith.maximumf %32, %33 : vector<8x640xf32>
    %c144 = arith.constant 144 : index
    %c0_18 = arith.constant 0 : index
    %35 = vector.load %arg2[%c144, %c0_18] : memref<250x640xf32, #tpu.memory_space<vmem>>, vector<8x640xf32>
    %36 = arith.maximumf %34, %35 : vector<8x640xf32>
    %c152 = arith.constant 152 : index
    %c0_19 = arith.constant 0 : index
    %37 = vector.load %arg2[%c152, %c0_19] : memref<250x640xf32, #tpu.memory_space<vmem>>, vector<8x640xf32>
    %38 = arith.maximumf %36, %37 : vector<8x640xf32>
    %c160 = arith.constant 160 : index
    %c0_20 = arith.constant 0 : index
    %39 = vector.load %arg2[%c160, %c0_20] : memref<250x640xf32, #tpu.memory_space<vmem>>, vector<8x640xf32>
    %40 = arith.maximumf %38, %39 : vector<8x640xf32>
    %c168 = arith.constant 168 : index
    %c0_21 = arith.constant 0 : index
    %41 = vector.load %arg2[%c168, %c0_21] : memref<250x640xf32, #tpu.memory_space<vmem>>, vector<8x640xf32>
    %42 = arith.maximumf %40, %41 : vector<8x640xf32>
    %c176 = arith.constant 176 : index
    %c0_22 = arith.constant 0 : index
    %43 = vector.load %arg2[%c176, %c0_22] : memref<250x640xf32, #tpu.memory_space<vmem>>, vector<8x640xf32>
    %44 = arith.maximumf %42, %43 : vector<8x640xf32>
    %c184 = arith.constant 184 : index
    %c0_23 = arith.constant 0 : index
    %45 = vector.load %arg2[%c184, %c0_23] : memref<250x640xf32, #tpu.memory_space<vmem>>, vector<8x640xf32>
    %46 = arith.maximumf %44, %45 : vector<8x640xf32>
    %c192 = arith.constant 192 : index
    %c0_24 = arith.constant 0 : index
    %47 = vector.load %arg2[%c192, %c0_24] : memref<250x640xf32, #tpu.memory_space<vmem>>, vector<8x640xf32>
    %48 = arith.maximumf %46, %47 : vector<8x640xf32>
    %c200 = arith.constant 200 : index
    %c0_25 = arith.constant 0 : index
    %49 = vector.load %arg2[%c200, %c0_25] : memref<250x640xf32, #tpu.memory_space<vmem>>, vector<8x640xf32>
    %50 = arith.maximumf %48, %49 : vector<8x640xf32>
    %c208 = arith.constant 208 : index
    %c0_26 = arith.constant 0 : index
    %51 = vector.load %arg2[%c208, %c0_26] : memref<250x640xf32, #tpu.memory_space<vmem>>, vector<8x640xf32>
    %52 = arith.maximumf %50, %51 : vector<8x640xf32>
    %c216 = arith.constant 216 : index
    %c0_27 = arith.constant 0 : index
    %53 = vector.load %arg2[%c216, %c0_27] : memref<250x640xf32, #tpu.memory_space<vmem>>, vector<8x640xf32>
    %54 = arith.maximumf %52, %53 : vector<8x640xf32>
    %c224 = arith.constant 224 : index
    %c0_28 = arith.constant 0 : index
    %55 = vector.load %arg2[%c224, %c0_28] : memref<250x640xf32, #tpu.memory_space<vmem>>, vector<8x640xf32>
    %56 = arith.maximumf %54, %55 : vector<8x640xf32>
    %c232 = arith.constant 232 : index
    %c0_29 = arith.constant 0 : index
    %57 = vector.load %arg2[%c232, %c0_29] : memref<250x640xf32, #tpu.memory_space<vmem>>, vector<8x640xf32>
    %58 = arith.maximumf %56, %57 : vector<8x640xf32>
    %c240 = arith.constant 240 : index
    %c0_30 = arith.constant 0 : index
    %59 = vector.load %arg2[%c240, %c0_30] : memref<250x640xf32, #tpu.memory_space<vmem>>, vector<8x640xf32>
    %60 = arith.maximumf %58, %59 : vector<8x640xf32>
    %c242 = arith.constant 242 : index
    %c0_31 = arith.constant 0 : index
    %61 = vector.load %arg2[%c242, %c0_31] : memref<250x640xf32, #tpu.memory_space<vmem>>, vector<8x640xf32>
    %62 = arith.maximumf %60, %61 : vector<8x640xf32>
    %cst = arith.constant dense<0xFF800000> : vector<640xf32>
    %63 = vector.multi_reduction <maximumf>, %62, %cst [0] : vector<8x640xf32> to vector<640xf32>
    %64 = vector.shape_cast %63 : vector<640xf32> to vector<1x640xf32>
    %c0_32 = arith.constant 0 : index
    %c0_33 = arith.constant 0 : index
    %65 = vector.load %arg3[%c0_32, %c0_33] : memref<1x640xf32, #tpu.memory_space<vmem>>, vector<1x640xf32>
    tpu.vector_store %arg3[%c0_32, %c0_33], %64 {strides = array<i32>} : memref<1x640xf32, #tpu.memory_space<vmem>>, vector<1x640xf32>,
    return
  }
  func.func @transform_0(%arg0: i32, %arg1: i32) -> (i32, i32) {
    %c0_i32 = arith.constant 0 : i32
    return %arg1, %arg0 : i32, i32
  }
  func.func @transform_1(%arg0: i32, %arg1: i32) -> (i32, i32) {
    %c0_i32 = arith.constant 0 : i32
    %c0_i32_0 = arith.constant 0 : i32
    return %c0_i32, %arg0 : i32, i32
  }
}

</mosaic_0001>

<llo_original>
// kernel: pool_max.1
$region0: #{pool_max.1}
  #allocation0 [shape = 'u32[]', space=smem, size = 0x4, offset = 0x4, fixed_abs, tag = 'smem constant byte address 0x4 - core index']
  #allocation1 [shape = 'u32[144,128]{1,0:T(1,128)}', space=vmem, size = 0x12000, scoped, tag = 'internal scratch']
  %s0 = inlined_call_operand.vmem [shape: f32[250,640], index: 0, kind: input, shape index: {}]
  %s1 = inlined_call_operand.vmem [shape: f32[1,640], index: 1, kind: output, shape index: {}]
  %s2 = sld [smem:[#allocation0]]
  $region14: #{pool_max.1} parent=0
    _
  %s4 = ssub.s32 1, %s2
  %s5 = scalar_select 0, %s4, %s2
  // Predicated region
  $region2: #{pool_max.1} parent=0 // pred_check
    _
  $region3: #{pool_max.1} parent=0 // pred_check_branch
    %7 = sbr.rel (0) target = $region5
  $region4: #{pool_max.1} parent=0 // pred_region
    _
  $region5: #{pool_max.1} parent=0 // pred_fallthru
    _
  %v8 = vld [vmem:[%s0] sm:$0xff]
  %v9 = vld [vmem:[%s0 + $0x8] sm:$0xff]
  %v10 = vld [vmem:[%s0 + $0x10] sm:$0xff]
  %v11 = vld [vmem:[%s0 + $0x18] sm:$0xff]
  %v12 = vld [vmem:[%s0 + $0x20] sm:$0xff]
  %v13 = vld [vmem:[%s0 + $0x28] sm:$0xff]
  %v14 = vld [vmem:[%s0 + $0x30] sm:$0xff]
  %v15 = vld [vmem:[%s0 + $0x38] sm:$0xff]
  %v16 = vld [vmem:[%s0 + $0x40] sm:$0xff]
  %v17 = vld [vmem:[%s0 + $0x48] sm:$0xff]
  %v18 = vmax.f32 %v8, %v13
  %v19 = vmax.f32 %v9, %v14
  %v20 = vmax.f32 %v10, %v15
  %v21 = vmax.f32 %v11, %v16
  %v22 = vmax.f32 %v12, %v17
  %v23 = vld [vmem:[%s0 + $0x50] sm:$0xff]
  %v24 = vld [vmem:[%s0 + $0x58] sm:$0xff]
  %v25 = vld [vmem:[%s0 + $0x60] sm:$0xff]
  %v26 = vld [vmem:[%s0 + $0x68] sm:$0xff]
  %v27 = vld [vmem:[%s0 + $0x70] sm:$0xff]
  %v28 = vmax.f32 %v18, %v23
  %v29 = vmax.f32 %v19, %v24
  %v30 = vmax.f32 %v20, %v25
  %v31 = vmax.f32 %v21, %v26
  %v32 = vmax.f32 %v22, %v27
  %v33 = vld [vmem:[%s0 + $0x78] sm:$0xff]
  %v34 = vld [vmem:[%s0 + $0x80] sm:$0xff]
  %v35 = vld [vmem:[%s0 + $0x88] sm:$0xff]
  %v36 = vld [vmem:[%s0 + $0x90] sm:$0xff]
  %v37 = vld [vmem:[%s0 + $0x98] sm:$0xff]
  %v38 = vmax.f32 %v28, %v33
  %v39 = vmax.f32 %v29, %v34
  %v40 = vmax.f32 %v30, %v35
  %v41 = vmax.f32 %v31, %v36
  %v42 = vmax.f32 %v32, %v37
  %v43 = vld [vmem:[%s0 + $0xa0] sm:$0xff]
  %v44 = vld [vmem:[%s0 + $0xa8] sm:$0xff]
  %v45 = vld [vmem:[%s0 + $0xb0] sm:$0xff]
  %v46 = vld [vmem:[%s0 + $0xb8] sm:$0xff]
  %v47 = vld [vmem:[%s0 + $0xc0] sm:$0xff]
  %v48 = vmax.f32 %v38, %v43
  %v49 = vmax.f32 %v39, %v44
  %v50 = vmax.f32 %v40, %v45
  %v51 = vmax.f32 %v41, %v46
  %v52 = vmax.f32 %v42, %v47
  %v53 = vld [vmem:[%s0 + $0xc8] sm:$0xff]
  %v54 = vld [vmem:[%s0 + $0xd0] sm:$0xff]
  %v55 = vld [vmem:[%s0 + $0xd8] sm:$0xff]
  %v56 = vld [vmem:[%s0 + $0xe0] sm:$0xff]
  %v57 = vld [vmem:[%s0 + $0xe8] sm:$0xff]
  %v58 = vmax.f32 %v48, %v53
  %v59 = vmax.f32 %v49, %v54
  %v60 = vmax.f32 %v50, %v55
  %v61 = vmax.f32 %v51, %v56
  %v62 = vmax.f32 %v52, %v57
  %v63 = vld [vmem:[%s0 + $0xf0] sm:$0xff]
  %v64 = vld [vmem:[%s0 + $0xf8] sm:$0xff]
  %v65 = vld [vmem:[%s0 + $0x100] sm:$0xff]
  %v66 = vld [vmem:[%s0 + $0x108] sm:$0xff]
  %v67 = vld [vmem:[%s0 + $0x110] sm:$0xff]
  %v68 = vmax.f32 %v58, %v63
  %v69 = vmax.f32 %v59, %v64
  %v70 = vmax.f32 %v60, %v65
  %v71 = vmax.f32 %v61, %v66
  %v72 = vmax.f32 %v62, %v67
  %v73 = vld [vmem:[%s0 + $0x118] sm:$0xff]
  %v74 = vld [vmem:[%s0 + $0x120] sm:$0xff]
  %v75 = vld [vmem:[%s0 + $0x128] sm:$0xff]
  %v76 = vld [vmem:[%s0 + $0x130] sm:$0xff]
  %v77 = vld [vmem:[%s0 + $0x138] sm:$0xff]
  %v78 = vmax.f32 %v68, %v73
  %v79 = vmax.f32 %v69, %v74
  %v80 = vmax.f32 %v70, %v75
  %v81 = vmax.f32 %v71, %v76
  %v82 = vmax.f32 %v72, %v77
  %v83 = vld [vmem:[%s0 + $0x140] sm:$0xff]
  %v84 = vld [vmem:[%s0 + $0x148] sm:$0xff]
  %v85 = vld [vmem:[%s0 + $0x150] sm:$0xff]
  %v86 = vld [vmem:[%s0 + $0x158] sm:$0xff]
  %v87 = vld [vmem:[%s0 + $0x160] sm:$0xff]
  %v88 = vmax.f32 %v78, %v83
  %v89 = vmax.f32 %v79, %v84
  %v90 = vmax.f32 %v80, %v85
  %v91 = vmax.f32 %v81, %v86
  %v92 = vmax.f32 %v82, %v87
  %v93 = vld [vmem:[%s0 + $0x168] sm:$0xff]
  %v94 = vld [vmem:[%s0 + $0x170] sm:$0xff]
  %v95 = vld [vmem:[%s0 + $0x178] sm:$0xff]
  %v96 = vld [vmem:[%s0 + $0x180] sm:$0xff]
  %v97 = vld [vmem:[%s0 + $0x188] sm:$0xff]
  %v98 = vmax.f32 %v88, %v93
  %v99 = vmax.f32 %v89, %v94
  %v100 = vmax.f32 %v90, %v95
  %v101 = vmax.f32 %v91, %v96
  %v102 = vmax.f32 %v92, %v97
  %v103 = vld [vmem:[%s0 + $0x190] sm:$0xff]
  %v104 = vld [vmem:[%s0 + $0x198] sm:$0xff]
  %v105 = vld [vmem:[%s0 + $0x1a0] sm:$0xff]
  %v106 = vld [vmem:[%s0 + $0x1a8] sm:$0xff]
  %v107 = vld [vmem:[%s0 + $0x1b0] sm:$0xff]
  %v108 = vmax.f32 %v98, %v103
  %v109 = vmax.f32 %v99, %v104
  %v110 = vmax.f32 %v100, %v105
  %v111 = vmax.f32 %v101, %v106
  %v112 = vmax.f32 %v102, %v107
  %v113 = vld [vmem:[%s0 + $0x1b8] sm:$0xff]
  %v114 = vld [vmem:[%s0 + $0x1c0] sm:$0xff]
  %v115 = vld [vmem:[%s0 + $0x1c8] sm:$0xff]
  %v116 = vld [vmem:[%s0 + $0x1d0] sm:$0xff]
  %v117 = vld [vmem:[%s0 + $0x1d8] sm:$0xff]
  %v118 = vmax.f32 %v108, %v113
  %v119 = vmax.f32 %v109, %v114
  %v120 = vmax.f32 %v110, %v115
  %v121 = vmax.f32 %v111, %v116
  %v122 = vmax.f32 %v112, %v117
  %v123 = vld [vmem:[%s0 + $0x1e0] sm:$0xff]
  %v124 = vld [vmem:[%s0 + $0x1e8] sm:$0xff]
  %v125 = vld [vmem:[%s0 + $0x1f0] sm:$0xff]
  %v126 = vld [vmem:[%s0 + $0x1f8] sm:$0xff]
  %v127 = vld [vmem:[%s0 + $0x200] sm:$0xff]
  %v128 = vmax.f32 %v118, %v123
  %v129 = vmax.f32 %v119, %v124
  %v130 = vmax.f32 %v120, %v125
  %v131 = vmax.f32 %v121, %v126
  %v132 = vmax.f32 %v122, %v127
  %v133 = vld [vmem:[%s0 + $0x208] sm:$0xff]
  %v134 = vld [vmem:[%s0 + $0x210] sm:$0xff]
  %v135 = vld [vmem:[%s0 + $0x218] sm:$0xff]
  %v136 = vld [vmem:[%s0 + $0x220] sm:$0xff]
  %v137 = vld [vmem:[%s0 + $0x228] sm:$0xff]
  %v138 = vmax.f32 %v128, %v133
  %v139 = vmax.f32 %v129, %v134
  %v140 = vmax.f32 %v130, %v135
  %v141 = vmax.f32 %v131, %v136
  %v142 = vmax.f32 %v132, %v137
  %v143 = vld [vmem:[%s0 + $0x230] sm:$0xff]
  %v144 = vld [vmem:[%s0 + $0x238] sm:$0xff]
  %v145 = vld [vmem:[%s0 + $0x240] sm:$0xff]
  %v146 = vld [vmem:[%s0 + $0x248] sm:$0xff]
  %v147 = vld [vmem:[%s0 + $0x250] sm:$0xff]
  %v148 = vmax.f32 %v138, %v143
  %v149 = vmax.f32 %v139, %v144
  %v150 = vmax.f32 %v140, %v145
  %v151 = vmax.f32 %v141, %v146
  %v152 = vmax.f32 %v142, %v147
  %v153 = vld [vmem:[%s0 + $0x258] sm:$0xff]
  %v154 = vld [vmem:[%s0 + $0x260] sm:$0xff]
  %v155 = vld [vmem:[%s0 + $0x268] sm:$0xff]
  %v156 = vld [vmem:[%s0 + $0x270] sm:$0xff]
  %v157 = vld [vmem:[%s0 + $0x278] sm:$0xff]
  %v158 = vmax.f32 %v148, %v153
  %v159 = vmax.f32 %v149, %v154
  %v160 = vmax.f32 %v150, %v155
  %v161 = vmax.f32 %v151, %v156
  %v162 = vmax.f32 %v152, %v157
  %v163 = vld [vmem:[%s0 + $0x280] sm:$0xff]
  %v164 = vld [vmem:[%s0 + $0x288] sm:$0xff]
  %v165 = vld [vmem:[%s0 + $0x290] sm:$0xff]
  %v166 = vld [vmem:[%s0 + $0x298] sm:$0xff]
  %v167 = vld [vmem:[%s0 + $0x2a0] sm:$0xff]
  %v168 = vmax.f32 %v158, %v163
  %v169 = vmax.f32 %v159, %v164
  %v170 = vmax.f32 %v160, %v165
  %v171 = vmax.f32 %v161, %v166
  %v172 = vmax.f32 %v162, %v167
  %v173 = vld [vmem:[%s0 + $0x2a8] sm:$0xff]
  %v174 = vld [vmem:[%s0 + $0x2b0] sm:$0xff]
  %v175 = vld [vmem:[%s0 + $0x2b8] sm:$0xff]
  %v176 = vld [vmem:[%s0 + $0x2c0] sm:$0xff]
  %v177 = vld [vmem:[%s0 + $0x2c8] sm:$0xff]
  %v178 = vmax.f32 %v168, %v173
  %v179 = vmax.f32 %v169, %v174
  %v180 = vmax.f32 %v170, %v175
  %v181 = vmax.f32 %v171, %v176
  %v182 = vmax.f32 %v172, %v177
  %v183 = vld [vmem:[%s0 + $0x2d0] sm:$0xff]
  %v184 = vld [vmem:[%s0 + $0x2d8] sm:$0xff]
  %v185 = vld [vmem:[%s0 + $0x2e0] sm:$0xff]
  %v186 = vld [vmem:[%s0 + $0x2e8] sm:$0xff]
  %v187 = vld [vmem:[%s0 + $0x2f0] sm:$0xff]
  %v188 = vmax.f32 %v178, %v183
  %v189 = vmax.f32 %v179, %v184
  %v190 = vmax.f32 %v180, %v185
  %v191 = vmax.f32 %v181, %v186
  %v192 = vmax.f32 %v182, %v187
  %v193 = vld [vmem:[%s0 + $0x2f8] sm:$0xff]
  %v194 = vld [vmem:[%s0 + $0x300] sm:$0xff]
  %v195 = vld [vmem:[%s0 + $0x308] sm:$0xff]
  %v196 = vld [vmem:[%s0 + $0x310] sm:$0xff]
  %v197 = vld [vmem:[%s0 + $0x318] sm:$0xff]
  %v198 = vmax.f32 %v188, %v193
  %v199 = vmax.f32 %v189, %v194
  %v200 = vmax.f32 %v190, %v195
  %v201 = vmax.f32 %v191, %v196
  %v202 = vmax.f32 %v192, %v197
  %v203 = vld [vmem:[%s0 + $0x320] sm:$0xff]
  %v204 = vld [vmem:[%s0 + $0x328] sm:$0xff]
  %v205 = vld [vmem:[%s0 + $0x330] sm:$0xff]
  %v206 = vld [vmem:[%s0 + $0x338] sm:$0xff]
  %v207 = vld [vmem:[%s0 + $0x340] sm:$0xff]
  %v208 = vmax.f32 %v198, %v203
  %v209 = vmax.f32 %v199, %v204
  %v210 = vmax.f32 %v200, %v205
  %v211 = vmax.f32 %v201, %v206
  %v212 = vmax.f32 %v202, %v207
  %v213 = vld [vmem:[%s0 + $0x348] sm:$0xff]
  %v214 = vld [vmem:[%s0 + $0x350] sm:$0xff]
  %v215 = vld [vmem:[%s0 + $0x358] sm:$0xff]
  %v216 = vld [vmem:[%s0 + $0x360] sm:$0xff]
  %v217 = vld [vmem:[%s0 + $0x368] sm:$0xff]
  %v218 = vmax.f32 %v208, %v213
  %v219 = vmax.f32 %v209, %v214
  %v220 = vmax.f32 %v210, %v215
  %v221 = vmax.f32 %v211, %v216
  %v222 = vmax.f32 %v212, %v217
  %v223 = vld [vmem:[%s0 + $0x370] sm:$0xff]
  %v224 = vld [vmem:[%s0 + $0x378] sm:$0xff]
  %v225 = vld [vmem:[%s0 + $0x380] sm:$0xff]
  %v226 = vld [vmem:[%s0 + $0x388] sm:$0xff]
  %v227 = vld [vmem:[%s0 + $0x390] sm:$0xff]
  %v228 = vmax.f32 %v218, %v223
  %v229 = vmax.f32 %v219, %v224
  %v230 = vmax.f32 %v220, %v225
  %v231 = vmax.f32 %v221, %v226
  %v232 = vmax.f32 %v222, %v227
  %v233 = vld [vmem:[%s0 + $0x398] sm:$0xff]
  %v234 = vld [vmem:[%s0 + $0x3a0] sm:$0xff]
  %v235 = vld [vmem:[%s0 + $0x3a8] sm:$0xff]
  %v236 = vld [vmem:[%s0 + $0x3b0] sm:$0xff]
  %v237 = vld [vmem:[%s0 + $0x3b8] sm:$0xff]
  %v238 = vmax.f32 %v228, %v233
  %v239 = vmax.f32 %v229, %v234
  %v240 = vmax.f32 %v230, %v235
  %v241 = vmax.f32 %v231, %v236
  %v242 = vmax.f32 %v232, %v237
  %v243 = vld [vmem:[%s0 + $0x3c0] sm:$0xff]
  %v244 = vld [vmem:[%s0 + $0x3c8] sm:$0xff]
  %v245 = vld [vmem:[%s0 + $0x3d0] sm:$0xff]
  %v246 = vld [vmem:[%s0 + $0x3d8] sm:$0xff]
  %v247 = vld [vmem:[%s0 + $0x3e0] sm:$0xff]
  %v248 = vmax.f32 %v238, %v243
  %v249 = vmax.f32 %v239, %v244
  %v250 = vmax.f32 %v240, %v245
  %v251 = vmax.f32 %v241, %v246
  %v252 = vmax.f32 %v242, %v247
  %v253 = vld [vmem:[%s0 + $0x3e8] sm:$0xff]
  %v254 = vld [vmem:[%s0 + $0x3f0] sm:$0xff]
  %v255 = vld [vmem:[%s0 + $0x3f8] sm:$0xff]
  %v256 = vld [vmem:[%s0 + $0x400] sm:$0xff]
  %v257 = vld [vmem:[%s0 + $0x408] sm:$0xff]
  %v258 = vmax.f32 %v248, %v253
  %v259 = vmax.f32 %v249, %v254
  %v260 = vmax.f32 %v250, %v255
  %v261 = vmax.f32 %v251, %v256
  %v262 = vmax.f32 %v252, %v257
  %v263 = vld [vmem:[%s0 + $0x410] sm:$0xff]
  %v264 = vld [vmem:[%s0 + $0x418] sm:$0xff]
  %v265 = vld [vmem:[%s0 + $0x420] sm:$0xff]
  %v266 = vld [vmem:[%s0 + $0x428] sm:$0xff]
  %v267 = vld [vmem:[%s0 + $0x430] sm:$0xff]
  %v268 = vmax.f32 %v258, %v263
  %v269 = vmax.f32 %v259, %v264
  %v270 = vmax.f32 %v260, %v265
  %v271 = vmax.f32 %v261, %v266
  %v272 = vmax.f32 %v262, %v267
  %v273 = vld [vmem:[%s0 + $0x438] sm:$0xff]
  %v274 = vld [vmem:[%s0 + $0x440] sm:$0xff]
  %v275 = vld [vmem:[%s0 + $0x448] sm:$0xff]
  %v276 = vld [vmem:[%s0 + $0x450] sm:$0xff]
  %v277 = vld [vmem:[%s0 + $0x458] sm:$0xff]
  %v278 = vmax.f32 %v268, %v273
  %v279 = vmax.f32 %v269, %v274
  %v280 = vmax.f32 %v270, %v275
  %v281 = vmax.f32 %v271, %v276
  %v282 = vmax.f32 %v272, %v277
  %v283 = vld [vmem:[%s0 + $0x460] sm:$0xff]
  %v284 = vld [vmem:[%s0 + $0x468] sm:$0xff]
  %v285 = vld [vmem:[%s0 + $0x470] sm:$0xff]
  %v286 = vld [vmem:[%s0 + $0x478] sm:$0xff]
  %v287 = vld [vmem:[%s0 + $0x480] sm:$0xff]
  %v288 = vmax.f32 %v278, %v283
  %v289 = vmax.f32 %v279, %v284
  %v290 = vmax.f32 %v280, %v285
  %v291 = vmax.f32 %v281, %v286
  %v292 = vmax.f32 %v282, %v287
  %v293 = vld [vmem:[%s0 + $0x488] sm:$0xff]
  %v294 = vld [vmem:[%s0 + $0x490] sm:$0xff]
  %v295 = vld [vmem:[%s0 + $0x498] sm:$0xff]
  %v296 = vld [vmem:[%s0 + $0x4a0] sm:$0xff]
  %v297 = vld [vmem:[%s0 + $0x4a8] sm:$0xff]
  %v298 = vmax.f32 %v288, %v293
  %v299 = vmax.f32 %v289, %v294
  %v300 = vmax.f32 %v290, %v295
  %v301 = vmax.f32 %v291, %v296
  %v302 = vmax.f32 %v292, %v297
  %v303 = vld [vmem:[%s0 + $0x4b0] sm:$0xff]
  %v304 = vld [vmem:[%s0 + $0x4b8] sm:$0xff]
  %v305 = vld [vmem:[%s0 + $0x4c0] sm:$0xff]
  %v306 = vld [vmem:[%s0 + $0x4c8] sm:$0xff]
  %v307 = vld [vmem:[%s0 + $0x4d0] sm:$0xff]
  %v308 = vmax.f32 %v298, %v303
  %v309 = vmax.f32 %v299, %v304
  %v310 = vmax.f32 %v300, %v305
  %v311 = vmax.f32 %v301, %v306
  %v312 = vmax.f32 %v302, %v307
  %v313 = vld [vmem:[%s0 + $0x4b0] sm:$0xfc]
  %v314 = vld [vmem:[%s0 + $0x4b8] sm:$0xfc]
  %v315 = vld [vmem:[%s0 + $0x4c0] sm:$0xfc]
  %v316 = vld [vmem:[%s0 + $0x4c8] sm:$0xfc]
  %v317 = vld [vmem:[%s0 + $0x4d0] sm:$0xfc]
  %v318 = vld [vmem:[%s0 + $0x4d8] sm:$0x3]
  %v319 = vld [vmem:[%s0 + $0x4e0] sm:$0x3]
  %v320 = vld [vmem:[%s0 + $0x4e8] sm:$0x3]
  %v321 = vld [vmem:[%s0 + $0x4f0] sm:$0x3]
  %v322 = vld [vmem:[%s0 + $0x4f8] sm:$0x3]
  %vm333 = vcmask 1045504
  %v334 = vrot.slane %v313, 2
  %v335 = vrot.slane %v318, 2
  %v336 = vsel %vm333, %v334, %v335
  %v337 = vrot.slane %v314, 2
  %v338 = vrot.slane %v319, 2
  %v339 = vsel %vm333, %v337, %v338
  %v340 = vrot.slane %v315, 2
  %v341 = vrot.slane %v320, 2
  %v342 = vsel %vm333, %v340, %v341
  %v343 = vrot.slane %v316, 2
  %v344 = vrot.slane %v321, 2
  %v345 = vsel %vm333, %v343, %v344
  %v346 = vrot.slane %v317, 2
  %v347 = vrot.slane %v322, 2
  %v348 = vsel %vm333, %v346, %v347
  %v354 = vmax.f32 %v308, %v336
  %v355 = vmax.f32 %v309, %v339
  %v356 = vmax.f32 %v310, %v342
  %v357 = vmax.f32 %v311, %v345
  %v358 = vmax.f32 %v312, %v348
  %v359 = vrot.slane %v354, 4
  %v360 = vmax.f32 %v354, %v359
  %v361 = vrot.slane %v360, 2
  %v362 = vmax.f32 %v360, %v361
  %v363 = vrot.slane %v362, 1
  %v364 = vmax.f32 %v362, %v363
  %v365 = vrot.slane %v355, 4
  %v366 = vmax.f32 %v355, %v365
  %v367 = vrot.slane %v366, 2
  %v368 = vmax.f32 %v366, %v367
  %v369 = vrot.slane %v368, 1
  %v370 = vmax.f32 %v368, %v369
  %v371 = vrot.slane %v356, 4
  %v372 = vmax.f32 %v356, %v371
  %v373 = vrot.slane %v372, 2
  %v374 = vmax.f32 %v372, %v373
  %v375 = vrot.slane %v374, 1
  %v376 = vmax.f32 %v374, %v375
  %v377 = vrot.slane %v357, 4
  %v378 = vmax.f32 %v357, %v377
  %v379 = vrot.slane %v378, 2
  %v380 = vmax.f32 %v378, %v379
  %v381 = vrot.slane %v380, 1
  %v382 = vmax.f32 %v380, %v381
  %v383 = vrot.slane %v358, 4
  %v384 = vmax.f32 %v358, %v383
  %v385 = vrot.slane %v384, 2
  %v386 = vmax.f32 %v384, %v385
  %v387 = vrot.slane %v386, 1
  %v388 = vmax.f32 %v386, %v387
  %v394 = vcombine.low %v364, %v370
  %v395 = vcombine.low %v376, %v382
  %v397 = vunpack.c.l.s4 1966171168
  %v398 = vunpack.c.0.s8 %v397
  %v399 = vlaneseq
  %v400 = vshrl.u32 %v399, 7
  %v401 = vsub.s32 %v398, %v400
  %v402 = vrot.slane %v394, %v401
  %v404 = vunpack.c.l.s4 1966171168
  %v405 = vunpack.c.0.s8 %v404
  %v406 = vlaneseq
  %v407 = vshrl.u32 %v406, 7
  %v408 = vsub.s32 %v405, %v407
  %v409 = vrot.slane %v395, %v408
  %v411 = vunpack.c.l.s4 1966171168
  %v412 = vunpack.c.0.s8 %v411
  %v413 = vlaneseq
  %v414 = vshrl.u32 %v413, 7
  %v415 = vsub.s32 %v412, %v414
  %v416 = vrot.slane %v388, %v415
  %v417 = vcombine.low %v402, %v409
  %v419 = vunpack.c.l.s4 1966171168
  %v420 = vunpack.c.0.s8 %v419
  %v421 = vlaneseq
  %v422 = vshrl.u32 %v421, 7
  %v423 = vsub.s32 %v420, %v422
  %v424 = vrot.slane %v417, %v423
  %v426 = vunpack.c.l.s4 1966171168
  %v427 = vunpack.c.0.s8 %v426
  %v428 = vlaneseq
  %v429 = vshrl.u32 %v428, 7
  %v430 = vsub.s32 %v427, %v429
  %v431 = vrot.slane %v416, %v430
  %v432 = vcombine.low %v424, %v431
  %v434 = vlaneseq
  %vm435 = vcmp.ge.s32.totalorder %v434, 0
  %vm436 = vcmp.lt.s32.totalorder %v434, 640
  %vm437 = vmand %vm435, %vm436
  %438 = vst.msk [vmem:[%s1] sm:$0x1f] %vm437, %v432
  // Predicated region
  $region6: #{pool_max.1} parent=0 // pred_check
    _
  $region7: #{pool_max.1} parent=0 // pred_check_branch
    %440 = sbr.rel (0) target = $region9
  $region8: #{pool_max.1} parent=0 // pred_region
    _
  $region9: #{pool_max.1} parent=0 // pred_fallthru
    _
  // Predicated region
  $region10: #{pool_max.1} parent=0 // pred_check
    _
  $region11: #{pool_max.1} parent=0 // pred_check_branch
    %442 = sbr.rel (0) target = $region13
  $region12: #{pool_max.1} parent=0 // pred_region
    _
  $region13: #{pool_max.1} parent=0 // pred_fallthru
    _

</llo_original>
